<compile_context>
chip_gen: v6e
topology: v6e:2x2x1
jax: 0.10.0
libtpu: 0.0.40
codegen_flags: <defaults>
</compile_context>

<pallas_src>
import jax
import jax.numpy as jnp
from jax.experimental import pallas as pl
from jax.experimental.pallas import tpu as pltpu


def _round_up(x, m):
    return ((x + m - 1) // m) * m


# ---------------------------------------------------------------------------
# Tiny-K path (Cin <= 8): x block is (tile_n, Cin*HW); w/shift live in SMEM.
# ---------------------------------------------------------------------------
def blocke_small_k_kernel(x_ref, w_ref, b_ref, o_ref):
    tn, cin_hw = x_ref.shape
    cout, cin = w_ref.shape
    hw = cin_hw // cin
    inv_hw = 1.0 / float(hw)

    # Hoist all scalar parameter reads (SMEM -> sregs) out of every loop.
    w_s = [[w_ref[o, c] for c in range(cin)] for o in range(cout)]
    b_s = [b_ref[o] for o in range(cout)]

    # Register-resident batch chunks: 8 (or 16) rows at a time so the live set
    # (Cin channel slices + one accumulator) stays well inside the vreg file.
    if tn > 8 and tn % 8 == 0:
        sub = 16 if (tn % 16 == 0 and 16 * cin * hw * 4 <= (64 << 10)) else 8
    else:
        sub = tn
    hoist_x = sub * cin * hw * 4 <= (64 << 10)
    n_chunks = tn // sub
    n_fold = hw // 128 if (hw % 128 == 0 and hw > 128) else 1

    def load_chunk(r0):
        # f32 upcast at load keeps the FMA chain valid on v5e (no bf16 VPU);
        # the upcast is per-chunk so vreg pressure stays small.
        return [x_ref[r0:r0 + sub, c * hw:(c + 1) * hw].astype(jnp.float32)
                for c in range(cin)]

    # Fully static loops: every slice offset is static (8-sublane / 128-lane
    # aligned) and the LLO scheduler sees the whole schedule.
    for k in range(n_chunks):
        r0 = k * sub
        xc = load_chunk(r0) if hoist_x else None
        for o in range(cout):
            xo = xc if hoist_x else load_chunk(r0)
            # Bias folded into the first FMA: no zeros init, no extra add.
            y = xo[0] * w_s[o][0] + b_s[o]
            for c in range(1, cin):
                y = y + xo[c] * w_s[o][c]
            y = jnp.maximum(y, 0.0)                       # ReLU before pooling
            # Pool: VPU-fold the 128-lane groups, then one XLU lane reduce.
            folded = y[:, 0:128] if n_fold > 1 else y
            for g in range(1, n_fold):
                folded = folded + y[:, g * 128:(g + 1) * 128]
            pooled = jnp.sum(folded, axis=-1, keepdims=True) * inv_hw
            o_ref[r0:r0 + sub, o:o + 1] = pooled.astype(o_ref.dtype)


# ---------------------------------------------------------------------------
# General path (Cin > 8): one batched MXU contraction per 8-row chunk.
# ---------------------------------------------------------------------------
def blocke_mxu_kernel(x_ref, w_ref, b_ref, o_ref):
    tn, cin, hw = x_ref.shape
    cout = w_ref.shape[0]
    inv_hw = 1.0 / float(hw)

    sub = 8 if (tn > 8 and tn % 8 == 0) else tn
    n_chunks = tn // sub

    b = b_ref[...]                                          # (Cout, 1)
    # Broadcast w once per grid step (NOT per chunk): (sub, Cout, Cin).
    wb = jnp.broadcast_to(w_ref[...][None], (sub, cout, cin)).astype(jnp.float32)

    for k in range(n_chunks):
        r0 = k * sub
        xc = x_ref[r0:r0 + sub].astype(jnp.float32)         # (sub, Cin, HW)
        # Single batched contraction over Cin for the whole chunk (MXU).
        y = jnp.einsum("noc,nch->noh", wb, xc,
                       preferred_element_type=jnp.float32)  # (sub, Cout, HW)
        y = jnp.maximum(y + b[None, :, :], 0.0)
        pooled = jnp.sum(y, axis=-1) * inv_hw                # (sub, Cout)
        o_ref[r0:r0 + sub, :] = pooled.astype(o_ref.dtype)


# ---------------------------------------------------------------------------
# Wrapper
# ---------------------------------------------------------------------------
def _pick_batch_tile(n, row_bytes, target_bytes=2 << 20):
    """Batch rows per grid step.

    Largest multiple-of-8 row tile whose activation block is ~target_bytes
    (double-buffered pair fits scoped VMEM on every generation, incl. v7x),
    while keeping >= 2 grid steps when the batch allows so the "parallel"
    axis can split across v7x's two TensorCores.
    """
    if n <= 8:
        return n
    tile = max(8, min(n, target_bytes // max(1, row_bytes)))
    if tile >= n:
        tile = (n + 1) // 2
    tile = max(8, (tile // 8) * 8)
    return min(tile, n)


def blocke_forward(x_nchw, conv_w, conv_b, gamma, beta, run_mean, run_var,
                   eps=1e-5):
    N, Cin, H, W = x_nchw.shape
    Cout = conv_w.shape[0]
    HW = H * W
    itemsize = jnp.dtype(x_nchw.dtype).itemsize

    # Fold BN (eval mode) + conv bias into a single affine:
    #   bn(conv(x)) = scale*(x@W + b - mean) + beta
    #               = x@(W*scale) + (beta + (b - mean)*scale)
    scale = gamma / jnp.sqrt(run_var + eps)
    w_eff = (conv_w.reshape(Cout, Cin) * scale[:, None]).astype(jnp.float32)
    shift = (beta + (conv_b - run_mean) * scale).astype(jnp.float32)

    if Cin <= 8:
        # Zero-cost contiguous reshape: batch rows dense on sublanes,
        # Cin*HW dense on lanes (no 2-4x Cin sublane padding).
        x = x_nchw.reshape(N, Cin * HW)
        row_bytes = _round_up(Cin * HW, 128) * itemsize
        tile_n = _pick_batch_tile(N, row_bytes)
        kernel = blocke_small_k_kernel
        in_specs = [
            pl.BlockSpec((tile_n, Cin * HW), lambda i: (i, 0)),
            pl.BlockSpec(memory_space=pltpu.MemorySpace.SMEM),   # w_eff scalars
            pl.BlockSpec(memory_space=pltpu.MemorySpace.SMEM),   # shift scalars
        ]
        args = (x, w_eff, shift)
    else:
        # General path: keep (Cin, HW) as the last two dims for the MXU;
        # account for Cin sublane padding when sizing the tile.
        x = x_nchw.reshape(N, Cin, HW)
        sub_pad = 8 if itemsize >= 4 else 16
        row_bytes = _round_up(Cin, sub_pad) * _round_up(HW, 128) * itemsize
        tile_n = _pick_batch_tile(N, row_bytes)
        kernel = blocke_mxu_kernel
        in_specs = [
            pl.BlockSpec((tile_n, Cin, HW), lambda i: (i, 0, 0)),
            pl.BlockSpec((Cout, Cin), lambda i: (0, 0)),
            pl.BlockSpec((Cout, 1), lambda i: (0, 0)),
        ]
        args = (x, w_eff, shift.reshape(Cout, 1))

    grid_n = pl.cdiv(N, tile_n)
    cost = pl.CostEstimate(
        flops=2 * N * HW * Cin * Cout + 2 * N * HW * Cout,
        transcendentals=0,
        bytes_accessed=(N * Cin * HW * itemsize + w_eff.size * 4
                        + shift.size * 4 + N * Cout * 4),
    )

    out = pl.pallas_call(
        kernel,
        out_shape=jax.ShapeDtypeStruct((N, Cout), jnp.float32),
        grid_spec=pltpu.PrefetchScalarGridSpec(
            num_scalar_prefetch=0,
            grid=(grid_n,),
            in_specs=in_specs,
            out_specs=pl.BlockSpec((tile_n, Cout), lambda i: (i, 0)),
        ),
        compiler_params=pltpu.CompilerParams(
            dimension_semantics=("parallel",),
            vmem_limit_bytes=32 * 1024 * 1024,
        ),
        cost_estimate=cost,
    )(*args)

    return out.reshape(N, Cout, 1, 1)


# ---------------------------------------------------------------------------
# Pure-JAX reference (no Pallas) for verification.
# ---------------------------------------------------------------------------
def blocke_reference(x_nchw, conv_w, conv_b, gamma, beta, run_mean, run_var,
                     eps=1e-5):
    N, Cin, H, W = x_nchw.shape
    Cout = conv_w.shape[0]
    x = x_nchw.reshape(N, Cin, H * W).astype(jnp.float32)
    w = conv_w.reshape(Cout, Cin).astype(jnp.float32)
    y = jnp.einsum("oc,nch->noh", w, x,
                   precision=jax.lax.Precision.HIGHEST) + conv_b[None, :, None]
    scale = gamma / jnp.sqrt(run_var + eps)
    y = (y - run_mean[None, :, None]) * scale[None, :, None] + beta[None, :, None]
    y = jnp.maximum(y, 0.0)
    return jnp.mean(y, axis=-1).reshape(N, Cout, 1, 1)


def _make_params(key, cin, cout):
    kw, kb, km = jax.random.split(key, 3)
    conv_w = jax.random.normal(kw, (cout, cin, 1, 1), dtype=jnp.float32) * 0.1  # Conv2d.weight
    conv_b = jax.random.normal(kb, (cout,), dtype=jnp.float32) * 0.1            # Conv2d.bias
    gamma = jnp.linspace(0.8, 1.2, cout, dtype=jnp.float32)                     # bn.weight
    beta = jnp.linspace(-0.1, 0.1, cout, dtype=jnp.float32)                     # bn.bias
    run_mean = jax.random.normal(km, (cout,), dtype=jnp.float32) * 0.05         # bn.running_mean
    run_var = jnp.linspace(0.9, 1.1, cout, dtype=jnp.float32)                   # bn.running_var
    return conv_w, conv_b, gamma, beta, run_mean, run_var


if __name__ == "__main__":
    key = jax.random.PRNGKey(0)
    k0, k1, k2, kp0, kp1 = jax.random.split(key, 5)

    # Case 1: BlockE(in_channels=4, out_channels=8) at the spec's small shapes.
    N, Cin, Cout, H, W = 2, 4, 8, 16, 16
    x = jax.random.normal(k0, (N, Cin, H, W), dtype=jnp.float32)
    params = _make_params(kp0, Cin, Cout)
    ref = blocke_reference(x, *params)
    out = jax.block_until_ready(blocke_forward(x, *params))
    assert out.shape == (N, Cout, 1, 1)
    assert jnp.allclose(out, ref, atol=1e-4, rtol=1e-4), "f32 tiny-K path mismatch"

    # Case 1b: bf16 activations (halves the HBM stream); kernel upcasts at load.
    x_bf16 = x.astype(jnp.bfloat16)
    ref_bf16 = blocke_reference(x_bf16.astype(jnp.float32), *params)
    out_bf16 = jax.block_until_ready(blocke_forward(x_bf16, *params))
    assert jnp.allclose(out_bf16, ref_bf16, atol=1e-3, rtol=1e-3), "bf16 path mismatch"

    # Case 2: larger batch -> multiple 8-row chunks and a 2-step "parallel" grid.
    N2 = 16
    x2 = jax.random.normal(k1, (N2, Cin, H, W), dtype=jnp.float32)
    ref2 = blocke_reference(x2, *params)
    out2 = jax.block_until_ready(blocke_forward(x2, *params))
    assert jnp.allclose(out2, ref2, atol=1e-4, rtol=1e-4), "multi-chunk path mismatch"

    # Case 3: Cin > 8 exercises the batched-MXU general path.
    Cin3, N3 = 16, 8
    x3 = jax.random.normal(k2, (N3, Cin3, H, W), dtype=jnp.float32)
    params3 = _make_params(kp1, Cin3, Cout)
    ref3 = blocke_reference(x3, *params3)
    out3 = jax.block_until_ready(blocke_forward(x3, *params3))
    assert jnp.allclose(out3, ref3, atol=1e-4, rtol=1e-4), "MXU path mismatch"

    print("KERNEL_OK")
</pallas_src>

<mosaic_0001>
module attributes {stable_mosaic.version = 11 : i64} {
  func.func @blocke_small_k_kernel(%arg0: i32, %arg1: memref<2x1024xf32, #tpu.memory_space<vmem>>, %arg2: memref<8x4xf32, #tpu.memory_space<smem>>, %arg3: memref<8xf32, #tpu.memory_space<smem>>, %arg4: memref<2x8xf32, #tpu.memory_space<vmem>>) attributes {dimension_semantics = [#tpu.dimension_semantics<parallel>], iteration_bounds = array<i64: 1>, scalar_prefetch = 0 : i64, scratch_operands = 0 : i64, tpu.core_type = #tpu.core_type<tc>, window_params = [{transform_indices = @transform_0, window_bounds = array<i64: 2, 1024>}, {transform_indices = @transform_1, window_bounds = array<i64: 8, 4>}, {transform_indices = @transform_2, window_bounds = array<i64: 8>}, {transform_indices = @transform_3, window_bounds = array<i64: 2, 8>}]} {
    %c0 = arith.constant 0 : index
    %c0_0 = arith.constant 0 : index
    %0 = memref.load %arg2[%c0, %c0_0] : memref<8x4xf32, #tpu.memory_space<smem>>
    %c0_1 = arith.constant 0 : index
    %c1 = arith.constant 1 : index
    %1 = memref.load %arg2[%c0_1, %c1] : memref<8x4xf32, #tpu.memory_space<smem>>
    %c0_2 = arith.constant 0 : index
    %c2 = arith.constant 2 : index
    %2 = memref.load %arg2[%c0_2, %c2] : memref<8x4xf32, #tpu.memory_space<smem>>
    %c0_3 = arith.constant 0 : index
    %c3 = arith.constant 3 : index
    %3 = memref.load %arg2[%c0_3, %c3] : memref<8x4xf32, #tpu.memory_space<smem>>
    %c1_4 = arith.constant 1 : index
    %c0_5 = arith.constant 0 : index
    %4 = memref.load %arg2[%c1_4, %c0_5] : memref<8x4xf32, #tpu.memory_space<smem>>
    %c1_6 = arith.constant 1 : index
    %c1_7 = arith.constant 1 : index
    %5 = memref.load %arg2[%c1_6, %c1_7] : memref<8x4xf32, #tpu.memory_space<smem>>
    %c1_8 = arith.constant 1 : index
    %c2_9 = arith.constant 2 : index
    %6 = memref.load %arg2[%c1_8, %c2_9] : memref<8x4xf32, #tpu.memory_space<smem>>
    %c1_10 = arith.constant 1 : index
    %c3_11 = arith.constant 3 : index
    %7 = memref.load %arg2[%c1_10, %c3_11] : memref<8x4xf32, #tpu.memory_space<smem>>
    %c2_12 = arith.constant 2 : index
    %c0_13 = arith.constant 0 : index
    %8 = memref.load %arg2[%c2_12, %c0_13] : memref<8x4xf32, #tpu.memory_space<smem>>
    %c2_14 = arith.constant 2 : index
    %c1_15 = arith.constant 1 : index
    %9 = memref.load %arg2[%c2_14, %c1_15] : memref<8x4xf32, #tpu.memory_space<smem>>
    %c2_16 = arith.constant 2 : index
    %c2_17 = arith.constant 2 : index
    %10 = memref.load %arg2[%c2_16, %c2_17] : memref<8x4xf32, #tpu.memory_space<smem>>
    %c2_18 = arith.constant 2 : index
    %c3_19 = arith.constant 3 : index
    %11 = memref.load %arg2[%c2_18, %c3_19] : memref<8x4xf32, #tpu.memory_space<smem>>
    %c3_20 = arith.constant 3 : index
    %c0_21 = arith.constant 0 : index
    %12 = memref.load %arg2[%c3_20, %c0_21] : memref<8x4xf32, #tpu.memory_space<smem>>
    %c3_22 = arith.constant 3 : index
    %c1_23 = arith.constant 1 : index
    %13 = memref.load %arg2[%c3_22, %c1_23] : memref<8x4xf32, #tpu.memory_space<smem>>
    %c3_24 = arith.constant 3 : index
    %c2_25 = arith.constant 2 : index
    %14 = memref.load %arg2[%c3_24, %c2_25] : memref<8x4xf32, #tpu.memory_space<smem>>
    %c3_26 = arith.constant 3 : index
    %c3_27 = arith.constant 3 : index
    %15 = memref.load %arg2[%c3_26, %c3_27] : memref<8x4xf32, #tpu.memory_space<smem>>
    %c4 = arith.constant 4 : index
    %c0_28 = arith.constant 0 : index
    %16 = memref.load %arg2[%c4, %c0_28] : memref<8x4xf32, #tpu.memory_space<smem>>
    %c4_29 = arith.constant 4 : index
    %c1_30 = arith.constant 1 : index
    %17 = memref.load %arg2[%c4_29, %c1_30] : memref<8x4xf32, #tpu.memory_space<smem>>
    %c4_31 = arith.constant 4 : index
    %c2_32 = arith.constant 2 : index
    %18 = memref.load %arg2[%c4_31, %c2_32] : memref<8x4xf32, #tpu.memory_space<smem>>
    %c4_33 = arith.constant 4 : index
    %c3_34 = arith.constant 3 : index
    %19 = memref.load %arg2[%c4_33, %c3_34] : memref<8x4xf32, #tpu.memory_space<smem>>
    %c5 = arith.constant 5 : index
    %c0_35 = arith.constant 0 : index
    %20 = memref.load %arg2[%c5, %c0_35] : memref<8x4xf32, #tpu.memory_space<smem>>
    %c5_36 = arith.constant 5 : index
    %c1_37 = arith.constant 1 : index
    %21 = memref.load %arg2[%c5_36, %c1_37] : memref<8x4xf32, #tpu.memory_space<smem>>
    %c5_38 = arith.constant 5 : index
    %c2_39 = arith.constant 2 : index
    %22 = memref.load %arg2[%c5_38, %c2_39] : memref<8x4xf32, #tpu.memory_space<smem>>
    %c5_40 = arith.constant 5 : index
    %c3_41 = arith.constant 3 : index
    %23 = memref.load %arg2[%c5_40, %c3_41] : memref<8x4xf32, #tpu.memory_space<smem>>
    %c6 = arith.constant 6 : index
    %c0_42 = arith.constant 0 : index
    %24 = memref.load %arg2[%c6, %c0_42] : memref<8x4xf32, #tpu.memory_space<smem>>
    %c6_43 = arith.constant 6 : index
    %c1_44 = arith.constant 1 : index
    %25 = memref.load %arg2[%c6_43, %c1_44] : memref<8x4xf32, #tpu.memory_space<smem>>
    %c6_45 = arith.constant 6 : index
    %c2_46 = arith.constant 2 : index
    %26 = memref.load %arg2[%c6_45, %c2_46] : memref<8x4xf32, #tpu.memory_space<smem>>
    %c6_47 = arith.constant 6 : index
    %c3_48 = arith.constant 3 : index
    %27 = memref.load %arg2[%c6_47, %c3_48] : memref<8x4xf32, #tpu.memory_space<smem>>
    %c7 = arith.constant 7 : index
    %c0_49 = arith.constant 0 : index
    %28 = memref.load %arg2[%c7, %c0_49] : memref<8x4xf32, #tpu.memory_space<smem>>
    %c7_50 = arith.constant 7 : index
    %c1_51 = arith.constant 1 : index
    %29 = memref.load %arg2[%c7_50, %c1_51] : memref<8x4xf32, #tpu.memory_space<smem>>
    %c7_52 = arith.constant 7 : index
    %c2_53 = arith.constant 2 : index
    %30 = memref.load %arg2[%c7_52, %c2_53] : memref<8x4xf32, #tpu.memory_space<smem>>
    %c7_54 = arith.constant 7 : index
    %c3_55 = arith.constant 3 : index
    %31 = memref.load %arg2[%c7_54, %c3_55] : memref<8x4xf32, #tpu.memory_space<smem>>
    %c0_56 = arith.constant 0 : index
    %32 = memref.load %arg3[%c0_56] : memref<8xf32, #tpu.memory_space<smem>>
    %c1_57 = arith.constant 1 : index
    %33 = memref.load %arg3[%c1_57] : memref<8xf32, #tpu.memory_space<smem>>
    %c2_58 = arith.constant 2 : index
    %34 = memref.load %arg3[%c2_58] : memref<8xf32, #tpu.memory_space<smem>>
    %c3_59 = arith.constant 3 : index
    %35 = memref.load %arg3[%c3_59] : memref<8xf32, #tpu.memory_space<smem>>
    %c4_60 = arith.constant 4 : index
    %36 = memref.load %arg3[%c4_60] : memref<8xf32, #tpu.memory_space<smem>>
    %c5_61 = arith.constant 5 : index
    %37 = memref.load %arg3[%c5_61] : memref<8xf32, #tpu.memory_space<smem>>
    %c6_62 = arith.constant 6 : index
    %38 = memref.load %arg3[%c6_62] : memref<8xf32, #tpu.memory_space<smem>>
    %c7_63 = arith.constant 7 : index
    %39 = memref.load %arg3[%c7_63] : memref<8xf32, #tpu.memory_space<smem>>
    %c0_64 = arith.constant 0 : index
    %c0_65 = arith.constant 0 : index
    %40 = vector.load %arg1[%c0_64, %c0_65] : memref<2x1024xf32, #tpu.memory_space<vmem>>, vector<2x256xf32>
    %c0_66 = arith.constant 0 : index
    %c256 = arith.constant 256 : index
    %41 = vector.load %arg1[%c0_66, %c256] : memref<2x1024xf32, #tpu.memory_space<vmem>>, vector<2x256xf32>
    %c0_67 = arith.constant 0 : index
    %c512 = arith.constant 512 : index
    %42 = vector.load %arg1[%c0_67, %c512] : memref<2x1024xf32, #tpu.memory_space<vmem>>, vector<2x256xf32>
    %c0_68 = arith.constant 0 : index
    %c768 = arith.constant 768 : index
    %43 = vector.load %arg1[%c0_68, %c768] : memref<2x1024xf32, #tpu.memory_space<vmem>>, vector<2x256xf32>
    %44 = vector.broadcast %0 : f32 to vector<2x256xf32>
    %45 = arith.mulf %40, %44 : vector<2x256xf32>
    %46 = vector.broadcast %32 : f32 to vector<2x256xf32>
    %47 = arith.addf %45, %46 : vector<2x256xf32>
    %48 = vector.broadcast %1 : f32 to vector<2x256xf32>
    %49 = arith.mulf %41, %48 : vector<2x256xf32>
    %50 = arith.addf %47, %49 : vector<2x256xf32>
    %51 = vector.broadcast %2 : f32 to vector<2x256xf32>
    %52 = arith.mulf %42, %51 : vector<2x256xf32>
    %53 = arith.addf %50, %52 : vector<2x256xf32>
    %54 = vector.broadcast %3 : f32 to vector<2x256xf32>
    %55 = arith.mulf %43, %54 : vector<2x256xf32>
    %56 = arith.addf %53, %55 : vector<2x256xf32>
    %cst = arith.constant 0.000000e+00 : f32
    %57 = vector.broadcast %cst : f32 to vector<2x256xf32>
    %58 = arith.maximumf %56, %57 : vector<2x256xf32>
    %59 = vector.extract_strided_slice %58 {offsets = [0, 0], sizes = [2, 128], strides = [1, 1]} : vector<2x256xf32> to vector<2x128xf32>
    %60 = vector.extract_strided_slice %58 {offsets = [0, 128], sizes = [2, 128], strides = [1, 1]} : vector<2x256xf32> to vector<2x128xf32>
    %61 = arith.addf %59, %60 : vector<2x128xf32>
    %cst_69 = arith.constant dense<0.000000e+00> : vector<2xf32>
    %62 = vector.multi_reduction <add>, %61, %cst_69 [1] : vector<2x128xf32> to vector<2xf32>
    %63 = vector.shape_cast %62 : vector<2xf32> to vector<2x1xf32>
    %cst_70 = arith.constant 3.906250e-03 : f32
    %64 = vector.broadcast %cst_70 : f32 to vector<2x1xf32>
    %65 = arith.mulf %63, %64 : vector<2x1xf32>
    %c0_71 = arith.constant 0 : index
    %c0_72 = arith.constant 0 : index
    %66 = vector.load %arg4[%c0_71, %c0_72] : memref<2x8xf32, #tpu.memory_space<vmem>>, vector<2x1xf32>
    tpu.vector_store %arg4[%c0_71, %c0_72], %65 {strides = array<i32>} : memref<2x8xf32, #tpu.memory_space<vmem>>, vector<2x1xf32>,
    %67 = vector.broadcast %4 : f32 to vector<2x256xf32>
    %68 = arith.mulf %40, %67 : vector<2x256xf32>
    %69 = vector.broadcast %33 : f32 to vector<2x256xf32>
    %70 = arith.addf %68, %69 : vector<2x256xf32>
    %71 = vector.broadcast %5 : f32 to vector<2x256xf32>
    %72 = arith.mulf %41, %71 : vector<2x256xf32>
    %73 = arith.addf %70, %72 : vector<2x256xf32>
    %74 = vector.broadcast %6 : f32 to vector<2x256xf32>
    %75 = arith.mulf %42, %74 : vector<2x256xf32>
    %76 = arith.addf %73, %75 : vector<2x256xf32>
    %77 = vector.broadcast %7 : f32 to vector<2x256xf32>
    %78 = arith.mulf %43, %77 : vector<2x256xf32>
    %79 = arith.addf %76, %78 : vector<2x256xf32>
    %cst_73 = arith.constant 0.000000e+00 : f32
    %80 = vector.broadcast %cst_73 : f32 to vector<2x256xf32>
    %81 = arith.maximumf %79, %80 : vector<2x256xf32>
    %82 = vector.extract_strided_slice %81 {offsets = [0, 0], sizes = [2, 128], strides = [1, 1]} : vector<2x256xf32> to vector<2x128xf32>
    %83 = vector.extract_strided_slice %81 {offsets = [0, 128], sizes = [2, 128], strides = [1, 1]} : vector<2x256xf32> to vector<2x128xf32>
    %84 = arith.addf %82, %83 : vector<2x128xf32>
    %cst_74 = arith.constant dense<0.000000e+00> : vector<2xf32>
    %85 = vector.multi_reduction <add>, %84, %cst_74 [1] : vector<2x128xf32> to vector<2xf32>
    %86 = vector.shape_cast %85 : vector<2xf32> to vector<2x1xf32>
    %cst_75 = arith.constant 3.906250e-03 : f32
    %87 = vector.broadcast %cst_75 : f32 to vector<2x1xf32>
    %88 = arith.mulf %86, %87 : vector<2x1xf32>
    %c0_76 = arith.constant 0 : index
    %c1_77 = arith.constant 1 : index
    %89 = vector.load %arg4[%c0_76, %c1_77] : memref<2x8xf32, #tpu.memory_space<vmem>>, vector<2x1xf32>
    tpu.vector_store %arg4[%c0_76, %c1_77], %88 {strides = array<i32>} : memref<2x8xf32, #tpu.memory_space<vmem>>, vector<2x1xf32>,
    %90 = vector.broadcast %8 : f32 to vector<2x256xf32>
    %91 = arith.mulf %40, %90 : vector<2x256xf32>
    %92 = vector.broadcast %34 : f32 to vector<2x256xf32>
    %93 = arith.addf %91, %92 : vector<2x256xf32>
    %94 = vector.broadcast %9 : f32 to vector<2x256xf32>
    %95 = arith.mulf %41, %94 : vector<2x256xf32>
    %96 = arith.addf %93, %95 : vector<2x256xf32>
    %97 = vector.broadcast %10 : f32 to vector<2x256xf32>
    %98 = arith.mulf %42, %97 : vector<2x256xf32>
    %99 = arith.addf %96, %98 : vector<2x256xf32>
    %100 = vector.broadcast %11 : f32 to vector<2x256xf32>
    %101 = arith.mulf %43, %100 : vector<2x256xf32>
    %102 = arith.addf %99, %101 : vector<2x256xf32>
    %cst_78 = arith.constant 0.000000e+00 : f32
    %103 = vector.broadcast %cst_78 : f32 to vector<2x256xf32>
    %104 = arith.maximumf %102, %103 : vector<2x256xf32>
    %105 = vector.extract_strided_slice %104 {offsets = [0, 0], sizes = [2, 128], strides = [1, 1]} : vector<2x256xf32> to vector<2x128xf32>
    %106 = vector.extract_strided_slice %104 {offsets = [0, 128], sizes = [2, 128], strides = [1, 1]} : vector<2x256xf32> to vector<2x128xf32>
    %107 = arith.addf %105, %106 : vector<2x128xf32>
    %cst_79 = arith.constant dense<0.000000e+00> : vector<2xf32>
    %108 = vector.multi_reduction <add>, %107, %cst_79 [1] : vector<2x128xf32> to vector<2xf32>
    %109 = vector.shape_cast %108 : vector<2xf32> to vector<2x1xf32>
    %cst_80 = arith.constant 3.906250e-03 : f32
    %110 = vector.broadcast %cst_80 : f32 to vector<2x1xf32>
    %111 = arith.mulf %109, %110 : vector<2x1xf32>
    %c0_81 = arith.constant 0 : index
    %c2_82 = arith.constant 2 : index
    %112 = vector.load %arg4[%c0_81, %c2_82] : memref<2x8xf32, #tpu.memory_space<vmem>>, vector<2x1xf32>
    tpu.vector_store %arg4[%c0_81, %c2_82], %111 {strides = array<i32>} : memref<2x8xf32, #tpu.memory_space<vmem>>, vector<2x1xf32>,
    %113 = vector.broadcast %12 : f32 to vector<2x256xf32>
    %114 = arith.mulf %40, %113 : vector<2x256xf32>
    %115 = vector.broadcast %35 : f32 to vector<2x256xf32>
    %116 = arith.addf %114, %115 : vector<2x256xf32>
    %117 = vector.broadcast %13 : f32 to vector<2x256xf32>
    %118 = arith.mulf %41, %117 : vector<2x256xf32>
    %119 = arith.addf %116, %118 : vector<2x256xf32>
    %120 = vector.broadcast %14 : f32 to vector<2x256xf32>
    %121 = arith.mulf %42, %120 : vector<2x256xf32>
    %122 = arith.addf %119, %121 : vector<2x256xf32>
    %123 = vector.broadcast %15 : f32 to vector<2x256xf32>
    %124 = arith.mulf %43, %123 : vector<2x256xf32>
    %125 = arith.addf %122, %124 : vector<2x256xf32>
    %cst_83 = arith.constant 0.000000e+00 : f32
    %126 = vector.broadcast %cst_83 : f32 to vector<2x256xf32>
    %127 = arith.maximumf %125, %126 : vector<2x256xf32>
    %128 = vector.extract_strided_slice %127 {offsets = [0, 0], sizes = [2, 128], strides = [1, 1]} : vector<2x256xf32> to vector<2x128xf32>
    %129 = vector.extract_strided_slice %127 {offsets = [0, 128], sizes = [2, 128], strides = [1, 1]} : vector<2x256xf32> to vector<2x128xf32>
    %130 = arith.addf %128, %129 : vector<2x128xf32>
    %cst_84 = arith.constant dense<0.000000e+00> : vector<2xf32>
    %131 = vector.multi_reduction <add>, %130, %cst_84 [1] : vector<2x128xf32> to vector<2xf32>
    %132 = vector.shape_cast %131 : vector<2xf32> to vector<2x1xf32>
    %cst_85 = arith.constant 3.906250e-03 : f32
    %133 = vector.broadcast %cst_85 : f32 to vector<2x1xf32>
    %134 = arith.mulf %132, %133 : vector<2x1xf32>
    %c0_86 = arith.constant 0 : index
    %c3_87 = arith.constant 3 : index
    %135 = vector.load %arg4[%c0_86, %c3_87] : memref<2x8xf32, #tpu.memory_space<vmem>>, vector<2x1xf32>
    tpu.vector_store %arg4[%c0_86, %c3_87], %134 {strides = array<i32>} : memref<2x8xf32, #tpu.memory_space<vmem>>, vector<2x1xf32>,
    %136 = vector.broadcast %16 : f32 to vector<2x256xf32>
    %137 = arith.mulf %40, %136 : vector<2x256xf32>
    %138 = vector.broadcast %36 : f32 to vector<2x256xf32>
    %139 = arith.addf %137, %138 : vector<2x256xf32>
    %140 = vector.broadcast %17 : f32 to vector<2x256xf32>
    %141 = arith.mulf %41, %140 : vector<2x256xf32>
    %142 = arith.addf %139, %141 : vector<2x256xf32>
    %143 = vector.broadcast %18 : f32 to vector<2x256xf32>
    %144 = arith.mulf %42, %143 : vector<2x256xf32>
    %145 = arith.addf %142, %144 : vector<2x256xf32>
    %146 = vector.broadcast %19 : f32 to vector<2x256xf32>
    %147 = arith.mulf %43, %146 : vector<2x256xf32>
    %148 = arith.addf %145, %147 : vector<2x256xf32>
    %cst_88 = arith.constant 0.000000e+00 : f32
    %149 = vector.broadcast %cst_88 : f32 to vector<2x256xf32>
    %150 = arith.maximumf %148, %149 : vector<2x256xf32>
    %151 = vector.extract_strided_slice %150 {offsets = [0, 0], sizes = [2, 128], strides = [1, 1]} : vector<2x256xf32> to vector<2x128xf32>
    %152 = vector.extract_strided_slice %150 {offsets = [0, 128], sizes = [2, 128], strides = [1, 1]} : vector<2x256xf32> to vector<2x128xf32>
    %153 = arith.addf %151, %152 : vector<2x128xf32>
    %cst_89 = arith.constant dense<0.000000e+00> : vector<2xf32>
    %154 = vector.multi_reduction <add>, %153, %cst_89 [1] : vector<2x128xf32> to vector<2xf32>
    %155 = vector.shape_cast %154 : vector<2xf32> to vector<2x1xf32>
    %cst_90 = arith.constant 3.906250e-03 : f32
    %156 = vector.broadcast %cst_90 : f32 to vector<2x1xf32>
    %157 = arith.mulf %155, %156 : vector<2x1xf32>
    %c0_91 = arith.constant 0 : index
    %c4_92 = arith.constant 4 : index
    %158 = vector.load %arg4[%c0_91, %c4_92] : memref<2x8xf32, #tpu.memory_space<vmem>>, vector<2x1xf32>
    tpu.vector_store %arg4[%c0_91, %c4_92], %157 {strides = array<i32>} : memref<2x8xf32, #tpu.memory_space<vmem>>, vector<2x1xf32>,
    %159 = vector.broadcast %20 : f32 to vector<2x256xf32>
    %160 = arith.mulf %40, %159 : vector<2x256xf32>
    %161 = vector.broadcast %37 : f32 to vector<2x256xf32>
    %162 = arith.addf %160, %161 : vector<2x256xf32>
    %163 = vector.broadcast %21 : f32 to vector<2x256xf32>
    %164 = arith.mulf %41, %163 : vector<2x256xf32>
    %165 = arith.addf %162, %164 : vector<2x256xf32>
    %166 = vector.broadcast %22 : f32 to vector<2x256xf32>
    %167 = arith.mulf %42, %166 : vector<2x256xf32>
    %168 = arith.addf %165, %167 : vector<2x256xf32>
    %169 = vector.broadcast %23 : f32 to vector<2x256xf32>
    %170 = arith.mulf %43, %169 : vector<2x256xf32>
    %171 = arith.addf %168, %170 : vector<2x256xf32>
    %cst_93 = arith.constant 0.000000e+00 : f32
    %172 = vector.broadcast %cst_93 : f32 to vector<2x256xf32>
    %173 = arith.maximumf %171, %172 : vector<2x256xf32>
    %174 = vector.extract_strided_slice %173 {offsets = [0, 0], sizes = [2, 128], strides = [1, 1]} : vector<2x256xf32> to vector<2x128xf32>
    %175 = vector.extract_strided_slice %173 {offsets = [0, 128], sizes = [2, 128], strides = [1, 1]} : vector<2x256xf32> to vector<2x128xf32>
    %176 = arith.addf %174, %175 : vector<2x128xf32>
    %cst_94 = arith.constant dense<0.000000e+00> : vector<2xf32>
    %177 = vector.multi_reduction <add>, %176, %cst_94 [1] : vector<2x128xf32> to vector<2xf32>
    %178 = vector.shape_cast %177 : vector<2xf32> to vector<2x1xf32>
    %cst_95 = arith.constant 3.906250e-03 : f32
    %179 = vector.broadcast %cst_95 : f32 to vector<2x1xf32>
    %180 = arith.mulf %178, %179 : vector<2x1xf32>
    %c0_96 = arith.constant 0 : index
    %c5_97 = arith.constant 5 : index
    %181 = vector.load %arg4[%c0_96, %c5_97] : memref<2x8xf32, #tpu.memory_space<vmem>>, vector<2x1xf32>
    tpu.vector_store %arg4[%c0_96, %c5_97], %180 {strides = array<i32>} : memref<2x8xf32, #tpu.memory_space<vmem>>, vector<2x1xf32>,
    %182 = vector.broadcast %24 : f32 to vector<2x256xf32>
    %183 = arith.mulf %40, %182 : vector<2x256xf32>
    %184 = vector.broadcast %38 : f32 to vector<2x256xf32>
    %185 = arith.addf %183, %184 : vector<2x256xf32>
    %186 = vector.broadcast %25 : f32 to vector<2x256xf32>
    %187 = arith.mulf %41, %186 : vector<2x256xf32>
    %188 = arith.addf %185, %187 : vector<2x256xf32>
    %189 = vector.broadcast %26 : f32 to vector<2x256xf32>
    %190 = arith.mulf %42, %189 : vector<2x256xf32>
    %191 = arith.addf %188, %190 : vector<2x256xf32>
    %192 = vector.broadcast %27 : f32 to vector<2x256xf32>
    %193 = arith.mulf %43, %192 : vector<2x256xf32>
    %194 = arith.addf %191, %193 : vector<2x256xf32>
    %cst_98 = arith.constant 0.000000e+00 : f32
    %195 = vector.broadcast %cst_98 : f32 to vector<2x256xf32>
    %196 = arith.maximumf %194, %195 : vector<2x256xf32>
    %197 = vector.extract_strided_slice %196 {offsets = [0, 0], sizes = [2, 128], strides = [1, 1]} : vector<2x256xf32> to vector<2x128xf32>
    %198 = vector.extract_strided_slice %196 {offsets = [0, 128], sizes = [2, 128], strides = [1, 1]} : vector<2x256xf32> to vector<2x128xf32>
    %199 = arith.addf %197, %198 : vector<2x128xf32>
    %cst_99 = arith.constant dense<0.000000e+00> : vector<2xf32>
    %200 = vector.multi_reduction <add>, %199, %cst_99 [1] : vector<2x128xf32> to vector<2xf32>
    %201 = vector.shape_cast %200 : vector<2xf32> to vector<2x1xf32>
    %cst_100 = arith.constant 3.906250e-03 : f32
    %202 = vector.broadcast %cst_100 : f32 to vector<2x1xf32>
    %203 = arith.mulf %201, %202 : vector<2x1xf32>
    %c0_101 = arith.constant 0 : index
    %c6_102 = arith.constant 6 : index
    %204 = vector.load %arg4[%c0_101, %c6_102] : memref<2x8xf32, #tpu.memory_space<vmem>>, vector<2x1xf32>
    tpu.vector_store %arg4[%c0_101, %c6_102], %203 {strides = array<i32>} : memref<2x8xf32, #tpu.memory_space<vmem>>, vector<2x1xf32>,
    %205 = vector.broadcast %28 : f32 to vector<2x256xf32>
    %206 = arith.mulf %40, %205 : vector<2x256xf32>
    %207 = vector.broadcast %39 : f32 to vector<2x256xf32>
    %208 = arith.addf %206, %207 : vector<2x256xf32>
    %209 = vector.broadcast %29 : f32 to vector<2x256xf32>
    %210 = arith.mulf %41, %209 : vector<2x256xf32>
    %211 = arith.addf %208, %210 : vector<2x256xf32>
    %212 = vector.broadcast %30 : f32 to vector<2x256xf32>
    %213 = arith.mulf %42, %212 : vector<2x256xf32>
    %214 = arith.addf %211, %213 : vector<2x256xf32>
    %215 = vector.broadcast %31 : f32 to vector<2x256xf32>
    %216 = arith.mulf %43, %215 : vector<2x256xf32>
    %217 = arith.addf %214, %216 : vector<2x256xf32>
    %cst_103 = arith.constant 0.000000e+00 : f32
    %218 = vector.broadcast %cst_103 : f32 to vector<2x256xf32>
    %219 = arith.maximumf %217, %218 : vector<2x256xf32>
    %220 = vector.extract_strided_slice %219 {offsets = [0, 0], sizes = [2, 128], strides = [1, 1]} : vector<2x256xf32> to vector<2x128xf32>
    %221 = vector.extract_strided_slice %219 {offsets = [0, 128], sizes = [2, 128], strides = [1, 1]} : vector<2x256xf32> to vector<2x128xf32>
    %222 = arith.addf %220, %221 : vector<2x128xf32>
    %cst_104 = arith.constant dense<0.000000e+00> : vector<2xf32>
    %223 = vector.multi_reduction <add>, %222, %cst_104 [1] : vector<2x128xf32> to vector<2xf32>
    %224 = vector.shape_cast %223 : vector<2xf32> to vector<2x1xf32>
    %cst_105 = arith.constant 3.906250e-03 : f32
    %225 = vector.broadcast %cst_105 : f32 to vector<2x1xf32>
    %226 = arith.mulf %224, %225 : vector<2x1xf32>
    %c0_106 = arith.constant 0 : index
    %c7_107 = arith.constant 7 : index
    %227 = vector.load %arg4[%c0_106, %c7_107] : memref<2x8xf32, #tpu.memory_space<vmem>>, vector<2x1xf32>
    tpu.vector_store %arg4[%c0_106, %c7_107], %226 {strides = array<i32>} : memref<2x8xf32, #tpu.memory_space<vmem>>, vector<2x1xf32>,
    return
  }
  func.func @transform_0(%arg0: i32) -> (i32, i32) {
    %c0_i32 = arith.constant 0 : i32
    %c0_i32_0 = arith.constant 0 : i32
    return %arg0, %c0_i32 : i32, i32
  }
  func.func @transform_1(%arg0: i32) -> (i32, i32) {
    %c0_i32 = arith.constant 0 : i32
    %c0_i32_0 = arith.constant 0 : i32
    %c0_i32_1 = arith.constant 0 : i32
    return %c0_i32, %c0_i32_0 : i32, i32
  }
  func.func @transform_2(%arg0: i32) -> i32 {
    %c0_i32 = arith.constant 0 : i32
    %c0_i32_0 = arith.constant 0 : i32
    return %c0_i32 : i32
  }
  func.func @transform_3(%arg0: i32) -> (i32, i32) {
    %c0_i32 = arith.constant 0 : i32
    %c0_i32_0 = arith.constant 0 : i32
    return %arg0, %c0_i32 : i32, i32
  }
}

</mosaic_0001>

<llo_original>
// kernel: tpu_custom_call.1
$region0: #{tpu_custom_call.1}
  #allocation0 [shape = 'u32[]', space=smem, size = 0x4, offset = 0x4, fixed_abs, tag = 'smem constant byte address 0x4 - core index']
  #allocation1 [shape = 'u32[144,128]{1,0:T(1,128)}', space=vmem, size = 0x12000, scoped, tag = 'internal scratch']
  %s0 = inlined_call_operand.hbm [shape: f32[2,1024], index: 0, kind: input, shape index: {}]
  %s1 = inlined_call_operand.vmem [shape: f32[8,4], index: 1, kind: input, shape index: {}]
  %s2 = inlined_call_operand.vmem [shape: f32[8], index: 2, kind: input, shape index: {}]
  %s3 = inlined_call_operand.hbm [shape: f32[2,8], index: 3, kind: output, shape index: {}]
  %s4 = sld [smem:[#allocation0]]
  $region34: #{tpu_custom_call.1} parent=0
    _
  %s6 = ssub.s32 1, %s4
  %s7 = scalar_select 0, %s6, %s4
  $region1: #{tpu_custom_call.1} parent=0
    #allocation2 [shape = 'u8[8192]{0}', space=vmem, size = 0x2000, scoped, tag = 'input window, operand 0, single buffered']
    #allocation3 [shape = 's32[1]{0}', space=sflag, size = 0x4, scoped, tag = 'scoped memory for tpu_custom_call.1']
    #allocation4 [shape = 's32[1]{0}', space=sflag, size = 0x4, scoped, tag = 'scoped memory for tpu_custom_call.1']
    #allocation5 [shape = 's32[1]{0}', space=sflag, size = 0x4, scoped, tag = 'scoped memory for tpu_custom_call.1']
    #allocation6 [shape = 'u8[4096]{0}', space=smem, size = 0x1000, scoped, tag = 'input window, operand 1, single buffered']
    #allocation7 [shape = 'u8[512]{0}', space=smem, size = 0x200, scoped, tag = 'input window, operand 2, single buffered']
    #allocation8 [shape = 's32[1]{0}', space=sflag, size = 0x4, scoped, tag = 'scoped memory for tpu_custom_call.1']
    #allocation9 [shape = 'u8[1024]{0}', space=vmem, size = 0x400, scoped, tag = 'output window, operand 0, single buffered']
    %8 = vsyncpa [#allocation3], 0
    %9 = vsyncpa [#allocation5], 0
    %10 = vsyncpa [#allocation8], 0
    %11 = vsyncpa [#allocation4], 0
    // Predicated region
    $region2: #{tpu_custom_call.1} parent=1 // pred_check
      _
    $region3: #{tpu_custom_call.1} parent=1 // pred_check_branch
      %13 = sbr.rel (0) target = $region5
    $region4: #{tpu_custom_call.1} parent=1 // pred_region
      %s15 = ssub.s32 256, 256
      %16 = vsyncadd [#allocation3], %s15
      %s18 = sshll.u32 [#allocation2], 4
      %s19 = int_to_ptr.vmem [resolvable:$true] %s18
      %21 = dma.hbm_to_vmem [thread:$0]  %s0, 256, %s19, [#allocation3]
    $region5: #{tpu_custom_call.1} parent=1 // pred_fallthru
      _
    // Predicated region
    $region6: #{tpu_custom_call.1} parent=1 // pred_check
      _
    $region7: #{tpu_custom_call.1} parent=1 // pred_check_branch
      %23 = sbr.rel (0) target = $region9
    $region8: #{tpu_custom_call.1} parent=1 // pred_region
      %s25 = ssub.s32 128, 128
      %26 = vsyncadd [#allocation5], %s25
      %s28 = sshll.u32 %s1, 4
      %s29 = int_to_ptr.vmem [resolvable:$true] %s28
      %31 = dma.vmem_to_smem %s29, 128, [#allocation6], [#allocation5]
    $region9: #{tpu_custom_call.1} parent=1 // pred_fallthru
      _
    // Predicated region
    $region10: #{tpu_custom_call.1} parent=1 // pred_check
      _
    $region11: #{tpu_custom_call.1} parent=1 // pred_check_branch
      %33 = sbr.rel (0) target = $region13
    $region12: #{tpu_custom_call.1} parent=1 // pred_region
      %s35 = ssub.s32 16, 16
      %36 = vsyncadd [#allocation8], %s35
      %s38 = sshll.u32 %s2, 4
      %s39 = int_to_ptr.vmem [resolvable:$true] %s38
      %41 = dma.vmem_to_smem %s39, 16, [#allocation7], [#allocation8]
    $region13: #{tpu_custom_call.1} parent=1 // pred_fallthru
      _
    // Predicated region
    $region14: #{tpu_custom_call.1} parent=1 // pred_check
      _
    $region15: #{tpu_custom_call.1} parent=1 // pred_check_branch
      %43 = sbr.rel (0) target = $region17
    $region16: #{tpu_custom_call.1} parent=1 // pred_region
      %44 = dma.done [#allocation3], 256
    $region17: #{tpu_custom_call.1} parent=1 // pred_fallthru
      _
    // Predicated region
    $region18: #{tpu_custom_call.1} parent=1 // pred_check
      _
    $region19: #{tpu_custom_call.1} parent=1 // pred_check_branch
      %46 = sbr.rel (0) target = $region21
    $region20: #{tpu_custom_call.1} parent=1 // pred_region
      %47 = dma.done [#allocation5], 128
    $region21: #{tpu_custom_call.1} parent=1 // pred_fallthru
      _
    // Predicated region
    $region22: #{tpu_custom_call.1} parent=1 // pred_check
      _
    $region23: #{tpu_custom_call.1} parent=1 // pred_check_branch
      %49 = sbr.rel (0) target = $region25
    $region24: #{tpu_custom_call.1} parent=1 // pred_region
      %50 = dma.done [#allocation8], 16
    $region25: #{tpu_custom_call.1} parent=1 // pred_fallthru
      _
    %51 = sfence
    %s52 = sld [smem:[#allocation6]]
    %s53 = sld [smem:[#allocation6 + $0x1]]
    %s54 = sld [smem:[#allocation6 + $0x2]]
    %s55 = sld [smem:[#allocation6 + $0x3]]
    %s56 = sld [smem:[#allocation6 + $0x80]]
    %s57 = sld [smem:[#allocation6 + $0x81]]
    %s58 = sld [smem:[#allocation6 + $0x82]]
    %s59 = sld [smem:[#allocation6 + $0x83]]
    %s60 = sld [smem:[#allocation6 + $0x100]]
    %s61 = sld [smem:[#allocation6 + $0x101]]
    %s62 = sld [smem:[#allocation6 + $0x102]]
    %s63 = sld [smem:[#allocation6 + $0x103]]
    %s64 = sld [smem:[#allocation6 + $0x180]]
    %s65 = sld [smem:[#allocation6 + $0x181]]
    %s66 = sld [smem:[#allocation6 + $0x182]]
    %s67 = sld [smem:[#allocation6 + $0x183]]
    %s68 = sld [smem:[#allocation6 + $0x200]]
    %s69 = sld [smem:[#allocation6 + $0x201]]
    %s70 = sld [smem:[#allocation6 + $0x202]]
    %s71 = sld [smem:[#allocation6 + $0x203]]
    %s72 = sld [smem:[#allocation6 + $0x280]]
    %s73 = sld [smem:[#allocation6 + $0x281]]
    %s74 = sld [smem:[#allocation6 + $0x282]]
    %s75 = sld [smem:[#allocation6 + $0x283]]
    %s76 = sld [smem:[#allocation6 + $0x300]]
    %s77 = sld [smem:[#allocation6 + $0x301]]
    %s78 = sld [smem:[#allocation6 + $0x302]]
    %s79 = sld [smem:[#allocation6 + $0x303]]
    %s80 = sld [smem:[#allocation6 + $0x380]]
    %s81 = sld [smem:[#allocation6 + $0x381]]
    %s82 = sld [smem:[#allocation6 + $0x382]]
    %s83 = sld [smem:[#allocation6 + $0x383]]
    %s84 = sld [smem:[#allocation7]]
    %s85 = sld [smem:[#allocation7 + $0x1]]
    %s86 = sld [smem:[#allocation7 + $0x2]]
    %s87 = sld [smem:[#allocation7 + $0x3]]
    %s88 = sld [smem:[#allocation7 + $0x4]]
    %s89 = sld [smem:[#allocation7 + $0x5]]
    %s90 = sld [smem:[#allocation7 + $0x6]]
    %s91 = sld [smem:[#allocation7 + $0x7]]
    %v92 = vld [vmem:[#allocation2] sm:$0xf]
    %v93 = vld [vmem:[#allocation2 + $0x4] sm:$0xf]
    %v94 = vld [vmem:[#allocation2 + $0x8] sm:$0xf]
    %v95 = vld [vmem:[#allocation2 + $0xc] sm:$0xf]
    %v96 = vstv %s52
    %v97 = vmul.f32 %v92, %v96
    %v98 = vstv %s84
    %v99 = vadd.f32 %v97, %v98
    %v100 = vstv %s53
    %v101 = vmul.f32 %v93, %v100
    %v102 = vadd.f32 %v99, %v101
    %v103 = vstv %s54
    %v104 = vmul.f32 %v94, %v103
    %v105 = vadd.f32 %v102, %v104
    %v106 = vstv %s55
    %v107 = vmul.f32 %v95, %v106
    %v108 = vadd.f32 %v105, %v107
    %v109 = vmax.f32 %v108, 0.0
    %v111 = vrot.slane %v109, 2
    %v113 = vadd.f32 %v109, %v111
    %vm114 = vcmask 1041408
    %v115 = vsel %vm114, %v113, 0.0
    %116 = vadd.xlane.f32.xlu0 %v115
    %v117 = vpop.xlane.xlu0 %116
    %v118 = vmul.f32 %v117, 0.00390625
    %vm119 = vcmask 1024
    %120 = vst.msk [vmem:[#allocation9] sm:$0x3] %vm119, %v118
    %v121 = vstv %s56
    %v122 = vmul.f32 %v92, %v121
    %v123 = vstv %s85
    %v124 = vadd.f32 %v122, %v123
    %v125 = vstv %s57
    %v126 = vmul.f32 %v93, %v125
    %v127 = vadd.f32 %v124, %v126
    %v128 = vstv %s58
    %v129 = vmul.f32 %v94, %v128
    %v130 = vadd.f32 %v127, %v129
    %v131 = vstv %s59
    %v132 = vmul.f32 %v95, %v131
    %v133 = vadd.f32 %v130, %v132
    %v134 = vmax.f32 %v133, 0.0
    %v136 = vrot.slane %v134, 2
    %v138 = vadd.f32 %v134, %v136
    %v139 = vsel %vm114, %v138, 0.0
    %140 = vadd.xlane.f32.xlu0 %v139
    %v141 = vpop.xlane.xlu0 %140
    %v142 = vmul.f32 %v141, 0.00390625
    %vm143 = vcmask 9224
    %144 = vst.msk [vmem:[#allocation9] sm:$0x3] %vm143, %v142
    %v145 = vstv %s60
    %v146 = vmul.f32 %v92, %v145
    %v147 = vstv %s86
    %v148 = vadd.f32 %v146, %v147
    %v149 = vstv %s61
    %v150 = vmul.f32 %v93, %v149
    %v151 = vadd.f32 %v148, %v150
    %v152 = vstv %s62
    %v153 = vmul.f32 %v94, %v152
    %v154 = vadd.f32 %v151, %v153
    %v155 = vstv %s63
    %v156 = vmul.f32 %v95, %v155
    %v157 = vadd.f32 %v154, %v156
    %v158 = vmax.f32 %v157, 0.0
    %v160 = vrot.slane %v158, 2
    %v162 = vadd.f32 %v158, %v160
    %v163 = vsel %vm114, %v162, 0.0
    %164 = vadd.xlane.f32.xlu0 %v163
    %v165 = vpop.xlane.xlu0 %164
    %v166 = vmul.f32 %v165, 0.00390625
    %vm167 = vcmask 17424
    %168 = vst.msk [vmem:[#allocation9] sm:$0x3] %vm167, %v166
    %v169 = vstv %s64
    %v170 = vmul.f32 %v92, %v169
    %v171 = vstv %s87
    %v172 = vadd.f32 %v170, %v171
    %v173 = vstv %s65
    %v174 = vmul.f32 %v93, %v173
    %v175 = vadd.f32 %v172, %v174
    %v176 = vstv %s66
    %v177 = vmul.f32 %v94, %v176
    %v178 = vadd.f32 %v175, %v177
    %v179 = vstv %s67
    %v180 = vmul.f32 %v95, %v179
    %v181 = vadd.f32 %v178, %v180
    %v182 = vmax.f32 %v181, 0.0
    %v184 = vrot.slane %v182, 2
    %v186 = vadd.f32 %v182, %v184
    %v187 = vsel %vm114, %v186, 0.0
    %188 = vadd.xlane.f32.xlu0 %v187
    %v189 = vpop.xlane.xlu0 %188
    %v190 = vmul.f32 %v189, 0.00390625
    %vm191 = vcmask 25624
    %192 = vst.msk [vmem:[#allocation9] sm:$0x3] %vm191, %v190
    %v193 = vstv %s68
    %v194 = vmul.f32 %v92, %v193
    %v195 = vstv %s88
    %v196 = vadd.f32 %v194, %v195
    %v197 = vstv %s69
    %v198 = vmul.f32 %v93, %v197
    %v199 = vadd.f32 %v196, %v198
    %v200 = vstv %s70
    %v201 = vmul.f32 %v94, %v200
    %v202 = vadd.f32 %v199, %v201
    %v203 = vstv %s71
    %v204 = vmul.f32 %v95, %v203
    %v205 = vadd.f32 %v202, %v204
    %v206 = vmax.f32 %v205, 0.0
    %v208 = vrot.slane %v206, 2
    %v210 = vadd.f32 %v206, %v208
    %v211 = vsel %vm114, %v210, 0.0
    %212 = vadd.xlane.f32.xlu0 %v211
    %v213 = vpop.xlane.xlu0 %212
    %v214 = vmul.f32 %v213, 0.00390625
    %vm215 = vcmask 33824
    %216 = vst.msk [vmem:[#allocation9] sm:$0x3] %vm215, %v214
    %v217 = vstv %s72
    %v218 = vmul.f32 %v92, %v217
    %v219 = vstv %s89
    %v220 = vadd.f32 %v218, %v219
    %v221 = vstv %s73
    %v222 = vmul.f32 %v93, %v221
    %v223 = vadd.f32 %v220, %v222
    %v224 = vstv %s74
    %v225 = vmul.f32 %v94, %v224
    %v226 = vadd.f32 %v223, %v225
    %v227 = vstv %s75
    %v228 = vmul.f32 %v95, %v227
    %v229 = vadd.f32 %v226, %v228
    %v230 = vmax.f32 %v229, 0.0
    %v232 = vrot.slane %v230, 2
    %v234 = vadd.f32 %v230, %v232
    %v235 = vsel %vm114, %v234, 0.0
    %236 = vadd.xlane.f32.xlu0 %v235
    %v237 = vpop.xlane.xlu0 %236
    %v238 = vmul.f32 %v237, 0.00390625
    %vm239 = vcmask 42024
    %240 = vst.msk [vmem:[#allocation9] sm:$0x3] %vm239, %v238
    %v241 = vstv %s76
    %v242 = vmul.f32 %v92, %v241
    %v243 = vstv %s90
    %v244 = vadd.f32 %v242, %v243
    %v245 = vstv %s77
    %v246 = vmul.f32 %v93, %v245
    %v247 = vadd.f32 %v244, %v246
    %v248 = vstv %s78
    %v249 = vmul.f32 %v94, %v248
    %v250 = vadd.f32 %v247, %v249
    %v251 = vstv %s79
    %v252 = vmul.f32 %v95, %v251
    %v253 = vadd.f32 %v250, %v252
    %v254 = vmax.f32 %v253, 0.0
    %v256 = vrot.slane %v254, 2
    %v258 = vadd.f32 %v254, %v256
    %v259 = vsel %vm114, %v258, 0.0
    %260 = vadd.xlane.f32.xlu0 %v259
    %v261 = vpop.xlane.xlu0 %260
    %v262 = vmul.f32 %v261, 0.00390625
    %vm263 = vcmask 50224
    %264 = vst.msk [vmem:[#allocation9] sm:$0x3] %vm263, %v262
    %v265 = vstv %s80
    %v266 = vmul.f32 %v92, %v265
    %v267 = vstv %s91
    %v268 = vadd.f32 %v266, %v267
    %v269 = vstv %s81
    %v270 = vmul.f32 %v93, %v269
    %v271 = vadd.f32 %v268, %v270
    %v272 = vstv %s82
    %v273 = vmul.f32 %v94, %v272
    %v274 = vadd.f32 %v271, %v273
    %v275 = vstv %s83
    %v276 = vmul.f32 %v95, %v275
    %v277 = vadd.f32 %v274, %v276
    %v278 = vmax.f32 %v277, 0.0
    %v280 = vrot.slane %v278, 2
    %v282 = vadd.f32 %v278, %v280
    %v283 = vsel %vm114, %v282, 0.0
    %284 = vadd.xlane.f32.xlu0 %v283
    %v285 = vpop.xlane.xlu0 %284
    %v286 = vmul.f32 %v285, 0.00390625
    %vm287 = vcmask 58424
    %288 = vst.msk [vmem:[#allocation9] sm:$0x3] %vm287, %v286
    // Predicated region
    $region26: #{tpu_custom_call.1} parent=1 // pred_check
      _
    $region27: #{tpu_custom_call.1} parent=1 // pred_check_branch
      %290 = sbr.rel (0) target = $region29
    $region28: #{tpu_custom_call.1} parent=1 // pred_region
      %s292 = ssub.s32 32, 32
      %293 = vsyncadd [#allocation4], %s292
      %s295 = sshll.u32 [#allocation9], 4
      %s296 = int_to_ptr.vmem [resolvable:$true] %s295
      %298 = dma.vmem_to_hbm [thread:$0]  %s296, 32, %s3, [#allocation4]
    $region29: #{tpu_custom_call.1} parent=1 // pred_fallthru
      _
    // Predicated region
    $region30: #{tpu_custom_call.1} parent=1 // pred_check
      _
    $region31: #{tpu_custom_call.1} parent=1 // pred_check_branch
      %300 = sbr.rel (0) target = $region33
    $region32: #{tpu_custom_call.1} parent=1 // pred_region
      %301 = dma.done [#allocation4], 32
    $region33: #{tpu_custom_call.1} parent=1 // pred_fallthru
      _
    %302 = vsyncpa [#allocation3], 1
    %303 = vsyncpa [#allocation4], 1
    %304 = vsyncpa [#allocation5], 1
    %305 = vsyncpa [#allocation8], 1

</llo_original>
